<compile_context>
chip_gen: v6e
topology: v6e:2x2x1
jax: 0.10.0
libtpu: 0.0.40
codegen_flags: <defaults>
</compile_context>

<pallas_src>
import functools

import jax
import jax.numpy as jnp
from jax.experimental import pallas as pl
from jax.experimental.pallas import tpu as pltpu


def _round_up(x, m):
    return ((x + m - 1) // m) * m


def actor_kernel(x_ref,                          # (TB, TK)   bf16  K-slice of obs
                 w1_ref, b1_ref,                 # (TK, H1p)  bf16, (1, H1p) f32
                 w2_ref, b2_ref,                 # (H1p, H2p) bf16, (1, H2p) f32
                 w3_ref, b3_ref,                 # (H2p, H3p) bf16, (1, H3p) f32
                 w4_ref, b4_ref,                 # (H3p, H4p) bf16, (1, H4p) f32
                 w5_ref, b5_ref,                 # (H4p, Ap)  bf16, (1, Ap)  f32
                 mu_ref,                         # (TB, Ap)   f32
                 acc_ref):                       # (TB, H1p)  f32 scratch
    k = pl.program_id(1)

    @pl.when(k == 0)
    def _init():
        # Fold the layer-1 bias into the accumulator init (saves a VPU pass
        # and a per-iteration broadcast at finalize).
        acc_ref[...] = jnp.broadcast_to(b1_ref[...], acc_ref.shape)

    # Layer 1, K-tiled: bf16 operands on the MXU, f32 accumulation in scratch.
    acc_ref[...] += jnp.dot(x_ref[...], w1_ref[...],
                            preferred_element_type=jnp.float32)

    @pl.when(k == pl.num_programs(1) - 1)
    def _finalize():
        def layer(h, w_ref, b_ref):
            acc = jnp.dot(h.astype(jnp.bfloat16), w_ref[...],
                          preferred_element_type=jnp.float32)
            return jnp.maximum(acc + b_ref[...], 0.0)

        h = jnp.maximum(acc_ref[...], 0.0)       # layer-1 ReLU (bias already in)
        h = layer(h, w2_ref, b2_ref)
        h = layer(h, w3_ref, b3_ref)
        h = layer(h, w4_ref, b4_ref)
        mu = layer(h, w5_ref, b5_ref)            # final ReLU: mu = relu(policy(obs))
        mu_ref[...] = mu.astype(mu_ref.dtype)


@functools.partial(jax.jit,
                   static_argnames=("batch_tile", "k_tile", "stream_buffers"))
def actor_forward(obs, std_scalar, params, *, batch_tile=128, k_tile=2048,
                  stream_buffers=2):
    """obs: (B, repr_dim) f32. std_scalar: scalar.
    params: w1..w5 stored (in, out), b1..b5 stored (1, out).
    Returns (mu, std), each (B, action_shape) f32."""
    assert batch_tile % 16 == 0, "batch tile must be a multiple of 16 (bf16 pack)"
    B, R = obs.shape
    A = params["w5"].shape[1]

    # ---- lane-dense zero-padding of all feature dims ------------------------
    out_dims = [params[f"w{i}"].shape[1] for i in range(1, 6)]
    out_p = [_round_up(d, 128) for d in out_dims]
    H1p, H2p, H3p, H4p, Ap = out_p

    # K-tiling of the layer-1 reduction (repr_dim).
    k_tile = max(128, _round_up(k_tile, 128))
    Rp128 = _round_up(R, 128)
    TK = min(k_tile, Rp128)
    Rp = _round_up(R, TK)
    in_p = [Rp] + out_p[:-1]

    ws, bs = [], []
    for i in range(1, 6):
        w, b = params[f"w{i}"], params[f"b{i}"]
        din, dout = w.shape
        w = jnp.pad(w.astype(jnp.float32),
                    ((0, in_p[i - 1] - din), (0, out_p[i - 1] - dout)))
        b = jnp.pad(b.astype(jnp.float32), ((0, 0), (0, out_p[i - 1] - dout)))
        ws.append(w.astype(jnp.bfloat16))        # bf16 weights: half the DMA bytes
        bs.append(b)

    # ---- batch tiling (only tile when B > batch_tile) ------------------------
    TB = min(batch_tile, _round_up(B, 16))
    Bp = _round_up(B, TB)
    obs_p = jnp.pad(obs.astype(jnp.float32),
                    ((0, Bp - B), (0, Rp - R))).astype(jnp.bfloat16)

    grid = (Bp // TB, Rp // TK)                  # reduction (K) axis last

    stream = pl.Buffered(stream_buffers)         # obs / w1 K-streams
    resident = pl.Buffered(1)                    # constant blocks: no 2nd buffer

    in_specs = [
        pl.BlockSpec((TB, TK), lambda i, k: (i, k), pipeline_mode=stream),
        pl.BlockSpec((TK, H1p), lambda i, k: (k, 0), pipeline_mode=stream),
        pl.BlockSpec(bs[0].shape, lambda i, k: (0, 0), pipeline_mode=resident),
        pl.BlockSpec(ws[1].shape, lambda i, k: (0, 0), pipeline_mode=resident),
        pl.BlockSpec(bs[1].shape, lambda i, k: (0, 0), pipeline_mode=resident),
        pl.BlockSpec(ws[2].shape, lambda i, k: (0, 0), pipeline_mode=resident),
        pl.BlockSpec(bs[2].shape, lambda i, k: (0, 0), pipeline_mode=resident),
        pl.BlockSpec(ws[3].shape, lambda i, k: (0, 0), pipeline_mode=resident),
        pl.BlockSpec(bs[3].shape, lambda i, k: (0, 0), pipeline_mode=resident),
        pl.BlockSpec(ws[4].shape, lambda i, k: (0, 0), pipeline_mode=resident),
        pl.BlockSpec(bs[4].shape, lambda i, k: (0, 0), pipeline_mode=resident),
    ]
    flat_args = [obs_p, ws[0], bs[0], ws[1], bs[1], ws[2], bs[2],
                 ws[3], bs[3], ws[4], bs[4]]
    out_specs = pl.BlockSpec((TB, Ap), lambda i, k: (i, 0))

    # ---- explicit VMEM budget (default scoped limit is 16/32 MiB) -----------
    resident_bytes = (sum(w.size * 2 for w in ws[1:])
                      + sum(b.size * 4 for b in bs))
    stream_bytes = (TB * TK * 2 + TK * H1p * 2) * stream_buffers
    out_bytes = TB * Ap * 4 * 2
    scratch_bytes = TB * H1p * 4
    temp_bytes = TB * (H1p + H2p + H3p + H4p + Ap) * 4 * 2
    vmem_limit = int(1.25 * (resident_bytes + stream_bytes + out_bytes
                             + scratch_bytes + temp_bytes)) + (2 << 20)
    vmem_limit = min(max(vmem_limit, 8 << 20), 56 << 20)   # fits v7x 64 MiB VMEM

    flops = 2 * Bp * sum(kdim * n for kdim, n in zip(in_p, out_p))
    bytes_accessed = (obs_p.size * 2
                      + sum(w.size * 2 for w in ws)
                      + sum(b.size * 4 for b in bs)
                      + Bp * Ap * 4)

    mu_p = pl.pallas_call(
        actor_kernel,
        out_shape=jax.ShapeDtypeStruct((Bp, Ap), jnp.float32),
        grid=grid,
        in_specs=in_specs,
        out_specs=out_specs,
        scratch_shapes=[pltpu.VMEM((TB, H1p), jnp.float32)],
        compiler_params=pltpu.CompilerParams(
            dimension_semantics=("parallel", "arbitrary"),
            vmem_limit_bytes=vmem_limit),
        cost_estimate=pl.CostEstimate(
            flops=flops, transcendentals=0, bytes_accessed=bytes_accessed),
    )(*flat_args)

    mu = mu_p[:B, :A]
    # std is a constant; never worth an HBM round-trip through the kernel.
    std = jnp.full((B, A), jnp.asarray(std_scalar, jnp.float32), jnp.float32)
    return mu, std


def init_params(key, repr_dim, hidden_dim, action_shape):
    """Deterministic synthetic init. Weights stored as (in, out) (transposed vs
    PyTorch); biases as (1, out) for in-kernel broadcast."""
    dims = [
        (repr_dim, hidden_dim),
        (hidden_dim, 2 * hidden_dim),
        (2 * hidden_dim, hidden_dim),
        (hidden_dim, hidden_dim),
        (hidden_dim, action_shape),
    ]
    params = {}
    keys = jax.random.split(key, len(dims))
    for i, ((din, dout), k) in enumerate(zip(dims, keys), start=1):
        scale = 1.0 / jnp.sqrt(jnp.asarray(din, jnp.float32))
        params[f"w{i}"] = jax.random.normal(k, (din, dout), jnp.float32) * scale
        params[f"b{i}"] = jnp.zeros((1, dout), jnp.float32)
    return params


def actor_reference(obs, std_scalar, params):
    """Pure-JAX reference of the same forward pass (same bf16-operand /
    f32-accumulation matmul path as the kernel)."""
    h = obs.astype(jnp.float32)
    for i in range(1, 6):
        w = params[f"w{i}"].astype(jnp.bfloat16)
        b = params[f"b{i}"].astype(jnp.float32)
        h = jnp.dot(h.astype(jnp.bfloat16), w,
                    preferred_element_type=jnp.float32) + b
        h = jnp.maximum(h, 0.0)
    mu = h
    std = jnp.full_like(mu, jnp.asarray(std_scalar, jnp.float32))
    return mu, std


if __name__ == "__main__":
    # Small shapes consistent with the module; chosen so both grid axes
    # (batch tiling and layer-1 K-tiling) and zero-padding are exercised.
    B = 32           # 2 batch-grid steps with batch_tile=16
    REPR_DIM = 200   # pads to 256 -> 2 K-grid steps with k_tile=128
    HIDDEN = 32      # hidden_dim
    ACTION = 8       # action_shape
    STD = 0.1

    key = jax.random.PRNGKey(0)
    k_obs, k_params = jax.random.split(key)
    obs = jax.random.normal(k_obs, (B, REPR_DIM), jnp.float32)
    params = init_params(k_params, REPR_DIM, HIDDEN, ACTION)

    mu, std = actor_forward(obs, STD, params, batch_tile=16, k_tile=128)
    jax.block_until_ready((mu, std))

    mu_ref, std_ref = actor_reference(obs, STD, params)
    assert mu.shape == (B, ACTION) and std.shape == (B, ACTION)
    assert jnp.allclose(mu, mu_ref, atol=1e-2, rtol=1e-2), (
        float(jnp.max(jnp.abs(mu - mu_ref))))
    assert jnp.allclose(std, std_ref, atol=1e-6, rtol=1e-6)

    print("KERNEL_OK")
</pallas_src>

<mosaic_0001>
module attributes {stable_mosaic.version = 11 : i64} {
  func.func @actor_kernel(%arg0: i32, %arg1: i32, %arg2: memref<16x128xbf16, #tpu.memory_space<vmem>>, %arg3: memref<128x128xbf16, #tpu.memory_space<vmem>>, %arg4: memref<1x128xf32, #tpu.memory_space<vmem>>, %arg5: memref<128x128xbf16, #tpu.memory_space<vmem>>, %arg6: memref<1x128xf32, #tpu.memory_space<vmem>>, %arg7: memref<128x128xbf16, #tpu.memory_space<vmem>>, %arg8: memref<1x128xf32, #tpu.memory_space<vmem>>, %arg9: memref<128x128xbf16, #tpu.memory_space<vmem>>, %arg10: memref<1x128xf32, #tpu.memory_space<vmem>>, %arg11: memref<128x128xbf16, #tpu.memory_space<vmem>>, %arg12: memref<1x128xf32, #tpu.memory_space<vmem>>, %arg13: memref<16x128xf32, #tpu.memory_space<vmem>>, %arg14: memref<16x128xf32, #tpu.memory_space<vmem>>) attributes {dimension_semantics = [#tpu.dimension_semantics<parallel>, #tpu.dimension_semantics<arbitrary>], iteration_bounds = array<i64: 2, 2>, scalar_prefetch = 0 : i64, scratch_operands = 1 : i64, tpu.core_type = #tpu.core_type<tc>, window_params = [{pipeline_mode = #tpu.pipeline_mode<double_buffered>, transform_indices = @transform_0, window_bounds = array<i64: 16, 128>}, {pipeline_mode = #tpu.pipeline_mode<double_buffered>, transform_indices = @transform_1, window_bounds = array<i64: 128, 128>}, {pipeline_mode = #tpu.pipeline_mode<synchronous>, transform_indices = @transform_2, window_bounds = array<i64: 1, 128>}, {pipeline_mode = #tpu.pipeline_mode<synchronous>, transform_indices = @transform_3, window_bounds = array<i64: 128, 128>}, {pipeline_mode = #tpu.pipeline_mode<synchronous>, transform_indices = @transform_4, window_bounds = array<i64: 1, 128>}, {pipeline_mode = #tpu.pipeline_mode<synchronous>, transform_indices = @transform_5, window_bounds = array<i64: 128, 128>}, {pipeline_mode = #tpu.pipeline_mode<synchronous>, transform_indices = @transform_6, window_bounds = array<i64: 1, 128>}, {pipeline_mode = #tpu.pipeline_mode<synchronous>, transform_indices = @transform_7, window_bounds = array<i64: 128, 128>}, {pipeline_mode = #tpu.pipeline_mode<synchronous>, transform_indices = @transform_8, window_bounds = array<i64: 1, 128>}, {pipeline_mode = #tpu.pipeline_mode<synchronous>, transform_indices = @transform_9, window_bounds = array<i64: 128, 128>}, {pipeline_mode = #tpu.pipeline_mode<synchronous>, transform_indices = @transform_10, window_bounds = array<i64: 1, 128>}, {transform_indices = @transform_11, window_bounds = array<i64: 16, 128>}]} {
    %c0_i32 = arith.constant 0 : i32
    %0 = arith.cmpi eq, %arg1, %c0_i32 : i32
    %1 = arith.extui %0 : i1 to i32
    %c0_i32_0 = arith.constant 0 : i32
    %2 = arith.cmpi ne, %1, %c0_i32_0 : i32
    scf.if %2 {
      %c0_9 = arith.constant 0 : index
      %c0_10 = arith.constant 0 : index
      %12 = vector.load %arg4[%c0_9, %c0_10] : memref<1x128xf32, #tpu.memory_space<vmem>>, vector<1x128xf32>
      %13 = vector.shape_cast %12 : vector<1x128xf32> to vector<1x128xf32>
      %14 = vector.broadcast %13 : vector<1x128xf32> to vector<16x128xf32>
      %c0_11 = arith.constant 0 : index
      %c0_12 = arith.constant 0 : index
      %15 = vector.load %arg14[%c0_11, %c0_12] : memref<16x128xf32, #tpu.memory_space<vmem>>, vector<16x128xf32>
      tpu.vector_store %arg14[%c0_11, %c0_12], %14 {strides = array<i32>} : memref<16x128xf32, #tpu.memory_space<vmem>>, vector<16x128xf32>,
    } else {
    }
    %c0 = arith.constant 0 : index
    %c0_1 = arith.constant 0 : index
    %3 = vector.load %arg14[%c0, %c0_1] : memref<16x128xf32, #tpu.memory_space<vmem>>, vector<16x128xf32>
    %c0_2 = arith.constant 0 : index
    %c0_3 = arith.constant 0 : index
    %4 = vector.load %arg2[%c0_2, %c0_3] : memref<16x128xbf16, #tpu.memory_space<vmem>>, vector<16x128xbf16>
    %c0_4 = arith.constant 0 : index
    %c0_5 = arith.constant 0 : index
    %5 = vector.load %arg3[%c0_4, %c0_5] : memref<128x128xbf16, #tpu.memory_space<vmem>>, vector<128x128xbf16>
    %cst = arith.constant dense<0.000000e+00> : vector<16x128xf32>
    %6 = tpu.matmul %4, %5, %cst {dimension_numbers = #tpu.dot_dimension_numbers<[1], [0], [0], [1], [0, 0, 1, 1], [], []>} : vector<16x128xbf16>, vector<128x128xbf16>, vector<16x128xf32> -> vector<16x128xf32>
    %7 = arith.addf %3, %6 : vector<16x128xf32>
    %c0_6 = arith.constant 0 : index
    %c0_7 = arith.constant 0 : index
    %8 = vector.load %arg14[%c0_6, %c0_7] : memref<16x128xf32, #tpu.memory_space<vmem>>, vector<16x128xf32>
    tpu.vector_store %arg14[%c0_6, %c0_7], %7 {strides = array<i32>} : memref<16x128xf32, #tpu.memory_space<vmem>>, vector<16x128xf32>,
    %c1_i32 = arith.constant 1 : i32
    %9 = arith.cmpi eq, %arg1, %c1_i32 : i32
    %10 = arith.extui %9 : i1 to i32
    %c0_i32_8 = arith.constant 0 : i32
    %11 = arith.cmpi ne, %10, %c0_i32_8 : i32
    scf.if %11 {
      %c0_9 = arith.constant 0 : index
      %c0_10 = arith.constant 0 : index
      %12 = vector.load %arg14[%c0_9, %c0_10] : memref<16x128xf32, #tpu.memory_space<vmem>>, vector<16x128xf32>
      %cst_11 = arith.constant 0.000000e+00 : f32
      %13 = vector.broadcast %cst_11 : f32 to vector<16x128xf32>
      %14 = arith.maximumf %12, %13 : vector<16x128xf32>
      %15 = arith.truncf %14 : vector<16x128xf32> to vector<16x128xbf16>
      %c0_12 = arith.constant 0 : index
      %c0_13 = arith.constant 0 : index
      %16 = vector.load %arg5[%c0_12, %c0_13] : memref<128x128xbf16, #tpu.memory_space<vmem>>, vector<128x128xbf16>
      %cst_14 = arith.constant dense<0.000000e+00> : vector<16x128xf32>
      %17 = tpu.matmul %15, %16, %cst_14 {dimension_numbers = #tpu.dot_dimension_numbers<[1], [0], [0], [1], [0, 0, 1, 1], [], []>} : vector<16x128xbf16>, vector<128x128xbf16>, vector<16x128xf32> -> vector<16x128xf32>
      %c0_15 = arith.constant 0 : index
      %c0_16 = arith.constant 0 : index
      %18 = vector.load %arg6[%c0_15, %c0_16] : memref<1x128xf32, #tpu.memory_space<vmem>>, vector<1x128xf32>
      %19 = vector.broadcast %18 : vector<1x128xf32> to vector<16x128xf32>
      %20 = arith.addf %17, %19 : vector<16x128xf32>
      %cst_17 = arith.constant 0.000000e+00 : f32
      %21 = vector.broadcast %cst_17 : f32 to vector<16x128xf32>
      %22 = arith.maximumf %20, %21 : vector<16x128xf32>
      %23 = arith.truncf %22 : vector<16x128xf32> to vector<16x128xbf16>
      %c0_18 = arith.constant 0 : index
      %c0_19 = arith.constant 0 : index
      %24 = vector.load %arg7[%c0_18, %c0_19] : memref<128x128xbf16, #tpu.memory_space<vmem>>, vector<128x128xbf16>
      %cst_20 = arith.constant dense<0.000000e+00> : vector<16x128xf32>
      %25 = tpu.matmul %23, %24, %cst_20 {dimension_numbers = #tpu.dot_dimension_numbers<[1], [0], [0], [1], [0, 0, 1, 1], [], []>} : vector<16x128xbf16>, vector<128x128xbf16>, vector<16x128xf32> -> vector<16x128xf32>
      %c0_21 = arith.constant 0 : index
      %c0_22 = arith.constant 0 : index
      %26 = vector.load %arg8[%c0_21, %c0_22] : memref<1x128xf32, #tpu.memory_space<vmem>>, vector<1x128xf32>
      %27 = vector.broadcast %26 : vector<1x128xf32> to vector<16x128xf32>
      %28 = arith.addf %25, %27 : vector<16x128xf32>
      %cst_23 = arith.constant 0.000000e+00 : f32
      %29 = vector.broadcast %cst_23 : f32 to vector<16x128xf32>
      %30 = arith.maximumf %28, %29 : vector<16x128xf32>
      %31 = arith.truncf %30 : vector<16x128xf32> to vector<16x128xbf16>
      %c0_24 = arith.constant 0 : index
      %c0_25 = arith.constant 0 : index
      %32 = vector.load %arg9[%c0_24, %c0_25] : memref<128x128xbf16, #tpu.memory_space<vmem>>, vector<128x128xbf16>
      %cst_26 = arith.constant dense<0.000000e+00> : vector<16x128xf32>
      %33 = tpu.matmul %31, %32, %cst_26 {dimension_numbers = #tpu.dot_dimension_numbers<[1], [0], [0], [1], [0, 0, 1, 1], [], []>} : vector<16x128xbf16>, vector<128x128xbf16>, vector<16x128xf32> -> vector<16x128xf32>
      %c0_27 = arith.constant 0 : index
      %c0_28 = arith.constant 0 : index
      %34 = vector.load %arg10[%c0_27, %c0_28] : memref<1x128xf32, #tpu.memory_space<vmem>>, vector<1x128xf32>
      %35 = vector.broadcast %34 : vector<1x128xf32> to vector<16x128xf32>
      %36 = arith.addf %33, %35 : vector<16x128xf32>
      %cst_29 = arith.constant 0.000000e+00 : f32
      %37 = vector.broadcast %cst_29 : f32 to vector<16x128xf32>
      %38 = arith.maximumf %36, %37 : vector<16x128xf32>
      %39 = arith.truncf %38 : vector<16x128xf32> to vector<16x128xbf16>
      %c0_30 = arith.constant 0 : index
      %c0_31 = arith.constant 0 : index
      %40 = vector.load %arg11[%c0_30, %c0_31] : memref<128x128xbf16, #tpu.memory_space<vmem>>, vector<128x128xbf16>
      %cst_32 = arith.constant dense<0.000000e+00> : vector<16x128xf32>
      %41 = tpu.matmul %39, %40, %cst_32 {dimension_numbers = #tpu.dot_dimension_numbers<[1], [0], [0], [1], [0, 0, 1, 1], [], []>} : vector<16x128xbf16>, vector<128x128xbf16>, vector<16x128xf32> -> vector<16x128xf32>
      %c0_33 = arith.constant 0 : index
      %c0_34 = arith.constant 0 : index
      %42 = vector.load %arg12[%c0_33, %c0_34] : memref<1x128xf32, #tpu.memory_space<vmem>>, vector<1x128xf32>
      %43 = vector.broadcast %42 : vector<1x128xf32> to vector<16x128xf32>
      %44 = arith.addf %41, %43 : vector<16x128xf32>
      %cst_35 = arith.constant 0.000000e+00 : f32
      %45 = vector.broadcast %cst_35 : f32 to vector<16x128xf32>
      %46 = arith.maximumf %44, %45 : vector<16x128xf32>
      %c0_36 = arith.constant 0 : index
      %c0_37 = arith.constant 0 : index
      %47 = vector.load %arg13[%c0_36, %c0_37] : memref<16x128xf32, #tpu.memory_space<vmem>>, vector<16x128xf32>
      tpu.vector_store %arg13[%c0_36, %c0_37], %46 {strides = array<i32>} : memref<16x128xf32, #tpu.memory_space<vmem>>, vector<16x128xf32>,
    } else {
    }
    return
  }
  func.func @transform_0(%arg0: i32, %arg1: i32) -> (i32, i32) {
    %c0_i32 = arith.constant 0 : i32
    return %arg0, %arg1 : i32, i32
  }
  func.func @transform_1(%arg0: i32, %arg1: i32) -> (i32, i32) {
    %c0_i32 = arith.constant 0 : i32
    %c0_i32_0 = arith.constant 0 : i32
    return %arg1, %c0_i32 : i32, i32
  }
  func.func @transform_2(%arg0: i32, %arg1: i32) -> (i32, i32) {
    %c0_i32 = arith.constant 0 : i32
    %c0_i32_0 = arith.constant 0 : i32
    %c0_i32_1 = arith.constant 0 : i32
    return %c0_i32, %c0_i32_0 : i32, i32
  }
  func.func @transform_3(%arg0: i32, %arg1: i32) -> (i32, i32) {
    %c0_i32 = arith.constant 0 : i32
    %c0_i32_0 = arith.constant 0 : i32
    %c0_i32_1 = arith.constant 0 : i32
    return %c0_i32, %c0_i32_0 : i32, i32
  }
  func.func @transform_4(%arg0: i32, %arg1: i32) -> (i32, i32) {
    %c0_i32 = arith.constant 0 : i32
    %c0_i32_0 = arith.constant 0 : i32
    %c0_i32_1 = arith.constant 0 : i32
    return %c0_i32, %c0_i32_0 : i32, i32
  }
  func.func @transform_5(%arg0: i32, %arg1: i32) -> (i32, i32) {
    %c0_i32 = arith.constant 0 : i32
    %c0_i32_0 = arith.constant 0 : i32
    %c0_i32_1 = arith.constant 0 : i32
    return %c0_i32, %c0_i32_0 : i32, i32
  }
  func.func @transform_6(%arg0: i32, %arg1: i32) -> (i32, i32) {
    %c0_i32 = arith.constant 0 : i32
    %c0_i32_0 = arith.constant 0 : i32
    %c0_i32_1 = arith.constant 0 : i32
    return %c0_i32, %c0_i32_0 : i32, i32
  }
  func.func @transform_7(%arg0: i32, %arg1: i32) -> (i32, i32) {
    %c0_i32 = arith.constant 0 : i32
    %c0_i32_0 = arith.constant 0 : i32
    %c0_i32_1 = arith.constant 0 : i32
    return %c0_i32, %c0_i32_0 : i32, i32
  }
  func.func @transform_8(%arg0: i32, %arg1: i32) -> (i32, i32) {
    %c0_i32 = arith.constant 0 : i32
    %c0_i32_0 = arith.constant 0 : i32
    %c0_i32_1 = arith.constant 0 : i32
    return %c0_i32, %c0_i32_0 : i32, i32
  }
  func.func @transform_9(%arg0: i32, %arg1: i32) -> (i32, i32) {
    %c0_i32 = arith.constant 0 : i32
    %c0_i32_0 = arith.constant 0 : i32
    %c0_i32_1 = arith.constant 0 : i32
    return %c0_i32, %c0_i32_0 : i32, i32
  }
  func.func @transform_10(%arg0: i32, %arg1: i32) -> (i32, i32) {
    %c0_i32 = arith.constant 0 : i32
    %c0_i32_0 = arith.constant 0 : i32
    %c0_i32_1 = arith.constant 0 : i32
    return %c0_i32, %c0_i32_0 : i32, i32
  }
  func.func @transform_11(%arg0: i32, %arg1: i32) -> (i32, i32) {
    %c0_i32 = arith.constant 0 : i32
    %c0_i32_0 = arith.constant 0 : i32
    return %arg0, %c0_i32 : i32, i32
  }
}

</mosaic_0001>

<llo_original>
// kernel: actor_forward.1
$region0: #{actor_forward.1}
  #allocation0 [shape = 'u32[]', space=smem, size = 0x4, offset = 0x4, fixed_abs, tag = 'smem constant byte address 0x4 - core index']
  #allocation1 [shape = 'u32[144,128]{1,0:T(1,128)}', space=vmem, size = 0x12000, scoped, tag = 'internal scratch']
  #allocation2 [shape = 'f32[16,128]{1,0:T(8,128)}', space=vmem, size = 0x2000, scoped, tag = 'scratch operand']
  %s0 = inlined_call_operand.vmem [shape: bf16[32,256], index: 0, kind: input, shape index: {}]
  %s1 = inlined_call_operand.vmem [shape: bf16[256,128], index: 1, kind: input, shape index: {}]
  %s2 = inlined_call_operand.vmem [shape: f32[1,128], index: 2, kind: input, shape index: {}]
  %s3 = inlined_call_operand.vmem [shape: bf16[128,128], index: 3, kind: input, shape index: {}]
  %s4 = inlined_call_operand.vmem [shape: f32[1,128], index: 4, kind: input, shape index: {}]
  %s5 = inlined_call_operand.vmem [shape: bf16[128,128], index: 5, kind: input, shape index: {}]
  %s6 = inlined_call_operand.vmem [shape: f32[1,128], index: 6, kind: input, shape index: {}]
  %s7 = inlined_call_operand.vmem [shape: bf16[128,128], index: 7, kind: input, shape index: {}]
  %s8 = inlined_call_operand.vmem [shape: f32[1,128], index: 8, kind: input, shape index: {}]
  %s9 = inlined_call_operand.vmem [shape: bf16[128,128], index: 9, kind: input, shape index: {}]
  %s10 = inlined_call_operand.vmem [shape: f32[1,128], index: 10, kind: input, shape index: {}]
  %s11 = inlined_call_operand.vmem [shape: f32[32,128], index: 11, kind: output, shape index: {}]
  %s12 = sld [smem:[#allocation0]]
  $region126: #{actor_forward.1} parent=0
    _
  %s14 = ssub.s32 1, %s12
  %s15 = scalar_select 0, %s14, %s12
  $region1: #{actor_forward.1} parent=0
    #allocation3 [shape = 'u8[8192]{0}', space=vmem, size = 0x2000, scoped, tag = 'input window, operand 0']
    loop: start=0, step=1, limit=6
    $region2: #{actor_forward.1} parent=1 // loop_pre_header
      _
    $region3: #{actor_forward.1} parent=1 // loop_header
      %s17 = sphi 0, %s21
      %p18 = scmp.ge.s32.totalorder %s17, 6
      %s24 = sphi 0, %s36
      %s25 = sphi 0, %s32
      %s26 = sphi 0, %s24
      %s27 = sphi 0, %s25
      %s28 = sphi 0, %s26
      %s29 = sphi 0, %s27
      %s41 = sphi 0, %s43
      %s44 = sphi 0, %s41
      %s45 = sphi 0, %s44
      %s61 = sphi 0, %s45
      %s67 = sphi 0, %s69
      %s70 = sphi 0, %s67
      %s71 = sphi 0, %s70
      %s87 = sphi 0, %s71
      %s91 = sphi 0, %s91
      %s93 = sphi 0, %s91
      %s94 = sphi 0, %s93
      %s108 = sphi 0, %s94
      %s112 = sphi 0, %s112
      %s114 = sphi 0, %s112
      %s115 = sphi 0, %s114
      %s129 = sphi 0, %s115
      %s133 = sphi 0, %s133
      %s135 = sphi 0, %s133
      %s136 = sphi 0, %s135
      %s150 = sphi 0, %s136
      %s154 = sphi 0, %s154
      %s156 = sphi 0, %s154
      %s157 = sphi 0, %s156
      %s171 = sphi 0, %s157
      %s175 = sphi 0, %s175
      %s177 = sphi 0, %s175
      %s178 = sphi 0, %s177
      %s192 = sphi 0, %s178
      %s196 = sphi 0, %s196
      %s198 = sphi 0, %s196
      %s199 = sphi 0, %s198
      %s213 = sphi 0, %s199
      %s217 = sphi 0, %s217
      %s219 = sphi 0, %s217
      %s220 = sphi 0, %s219
      %s234 = sphi 0, %s220
      %s238 = sphi 0, %s238
      %s240 = sphi 0, %s238
      %s241 = sphi 0, %s240
      %s255 = sphi 0, %s241
      %s259 = sphi 0, %s259
      %s261 = sphi 0, %s259
      %s262 = sphi 0, %s261
      %s276 = sphi 0, %s262
      %s282 = sphi 0, %s284
      %s285 = sphi 0, %s282
      %s286 = sphi 0, %s285
      %s302 = sphi 0, %s286
    $region4: #{actor_forward.1} parent=1 // loop_header_branch
      %20 = sbr.rel (%p18) target = $region8
    $region5: #{actor_forward.1} parent=1 // loop_body
      %s22 = ssub.s32 %s17, 1
      %s23 = ssub.s32 %s17, 2
      %s30 = sadd.s32 1, %s25
      %p31 = scmp.ge.s32.totalorder %s30, 2
      %s32 = scalar_select %p31, 0, %s30
      %s33 = sadd.s32 1, %s24
      %s34 = scalar_select %p31, %s33, %s24
      %p35 = scmp.ge.s32.totalorder %s34, 2
      %s36 = scalar_select %p35, 0, %s34
      %s37 = ssub.s32 %s24, %s36
      %s38 = ssub.s32 %s25, %s32
      %s39 = sor.u32 %s37, %s38
      %p40 = scmp.eq.s32.totalorder %s39, 0
      %s42 = sadd.s32 %s41, 1
      %s43 = scalar_select %p40, %s41, %s42
      %p46 = pneg %p40
      %p47 = scmp.eq.s32.totalorder %s17, 3
      %p48 = por %p46, %p47
      %p49 = scmp.ne.s32.totalorder %s41, %s44
      %p50 = scmp.eq.s32.totalorder %s17, 0
      %p51 = por %p49, %p50
      %p52 = scmp.ne.s32.totalorder %s41, %s44
      %p53 = scmp.eq.s32.totalorder %s22, 3
      %p54 = por %p52, %p53
      %p55 = scmp.ne.s32.totalorder %s44, %s45
      %p56 = scmp.eq.s32.totalorder %s22, 0
      %p57 = por %p55, %p56
      %p58 = scmp.ne.s32.totalorder %s44, %s45
      %p59 = scmp.eq.s32.totalorder %s23, 3
      %p60 = por %p58, %p59
      %p62 = scmp.ne.s32.totalorder %s45, %s61
      %p63 = scmp.eq.s32.totalorder %s23, 0
      %p64 = por %p62, %p63
      %s65 = ssub.s32 %s25, %s32
      %p66 = scmp.eq.s32.totalorder %s65, 0
      %s68 = sadd.s32 %s67, 1
      %s69 = scalar_select %p66, %s67, %s68
      %p72 = pneg %p66
      %p73 = scmp.eq.s32.totalorder %s17, 3
      %p74 = por %p72, %p73
      %p75 = scmp.ne.s32.totalorder %s67, %s70
      %p76 = scmp.eq.s32.totalorder %s17, 0
      %p77 = por %p75, %p76
      %p78 = scmp.ne.s32.totalorder %s67, %s70
      %p79 = scmp.eq.s32.totalorder %s22, 3
      %p80 = por %p78, %p79
      %p81 = scmp.ne.s32.totalorder %s70, %s71
      %p82 = scmp.eq.s32.totalorder %s22, 0
      %p83 = por %p81, %p82
      %p84 = scmp.ne.s32.totalorder %s70, %s71
      %p85 = scmp.eq.s32.totalorder %s23, 3
      %p86 = por %p84, %p85
      %p88 = scmp.ne.s32.totalorder %s71, %s87
      %p89 = scmp.eq.s32.totalorder %s23, 0
      %p90 = por %p88, %p89
      %s92 = sadd.s32 %s91, 1
      %p95 = scmp.eq.s32.totalorder %s17, 3
      %p96 = scmp.ne.s32.totalorder %s91, %s93
      %p97 = scmp.eq.s32.totalorder %s17, 0
      %p98 = por %p96, %p97
      %p99 = scmp.ne.s32.totalorder %s91, %s93
      %p100 = scmp.eq.s32.totalorder %s22, 3
      %p101 = por %p99, %p100
      %p102 = scmp.ne.s32.totalorder %s93, %s94
      %p103 = scmp.eq.s32.totalorder %s22, 0
      %p104 = por %p102, %p103
      %p105 = scmp.ne.s32.totalorder %s93, %s94
      %p106 = scmp.eq.s32.totalorder %s23, 3
      %p107 = por %p105, %p106
      %p109 = scmp.ne.s32.totalorder %s94, %s108
      %p110 = scmp.eq.s32.totalorder %s23, 0
      %p111 = por %p109, %p110
      %s113 = sadd.s32 %s112, 1
      %p116 = scmp.eq.s32.totalorder %s17, 3
      %p117 = scmp.ne.s32.totalorder %s112, %s114
      %p118 = scmp.eq.s32.totalorder %s17, 0
      %p119 = por %p117, %p118
      %p120 = scmp.ne.s32.totalorder %s112, %s114
      %p121 = scmp.eq.s32.totalorder %s22, 3
      %p122 = por %p120, %p121
      %p123 = scmp.ne.s32.totalorder %s114, %s115
      %p124 = scmp.eq.s32.totalorder %s22, 0
      %p125 = por %p123, %p124
      %p126 = scmp.ne.s32.totalorder %s114, %s115
      %p127 = scmp.eq.s32.totalorder %s23, 3
      %p128 = por %p126, %p127
      %p130 = scmp.ne.s32.totalorder %s115, %s129
      %p131 = scmp.eq.s32.totalorder %s23, 0
      %p132 = por %p130, %p131
      %s134 = sadd.s32 %s133, 1
      %p137 = scmp.eq.s32.totalorder %s17, 3
      %p138 = scmp.ne.s32.totalorder %s133, %s135
      %p139 = scmp.eq.s32.totalorder %s17, 0
      %p140 = por %p138, %p139
      %p141 = scmp.ne.s32.totalorder %s133, %s135
      %p142 = scmp.eq.s32.totalorder %s22, 3
      %p143 = por %p141, %p142
      %p144 = scmp.ne.s32.totalorder %s135, %s136
      %p145 = scmp.eq.s32.totalorder %s22, 0
      %p146 = por %p144, %p145
      %p147 = scmp.ne.s32.totalorder %s135, %s136
      %p148 = scmp.eq.s32.totalorder %s23, 3
      %p149 = por %p147, %p148
      %p151 = scmp.ne.s32.totalorder %s136, %s150
      %p152 = scmp.eq.s32.totalorder %s23, 0
      %p153 = por %p151, %p152
      %s155 = sadd.s32 %s154, 1
      %p158 = scmp.eq.s32.totalorder %s17, 3
      %p159 = scmp.ne.s32.totalorder %s154, %s156
      %p160 = scmp.eq.s32.totalorder %s17, 0
      %p161 = por %p159, %p160
      %p162 = scmp.ne.s32.totalorder %s154, %s156
      %p163 = scmp.eq.s32.totalorder %s22, 3
      %p164 = por %p162, %p163
      %p165 = scmp.ne.s32.totalorder %s156, %s157
      %p166 = scmp.eq.s32.totalorder %s22, 0
      %p167 = por %p165, %p166
      %p168 = scmp.ne.s32.totalorder %s156, %s157
      %p169 = scmp.eq.s32.totalorder %s23, 3
      %p170 = por %p168, %p169
      %p172 = scmp.ne.s32.totalorder %s157, %s171
      %p173 = scmp.eq.s32.totalorder %s23, 0
      %p174 = por %p172, %p173
      %s176 = sadd.s32 %s175, 1
      %p179 = scmp.eq.s32.totalorder %s17, 3
      %p180 = scmp.ne.s32.totalorder %s175, %s177
      %p181 = scmp.eq.s32.totalorder %s17, 0
      %p182 = por %p180, %p181
      %p183 = scmp.ne.s32.totalorder %s175, %s177
      %p184 = scmp.eq.s32.totalorder %s22, 3
      %p185 = por %p183, %p184
      %p186 = scmp.ne.s32.totalorder %s177, %s178
      %p187 = scmp.eq.s32.totalorder %s22, 0
      %p188 = por %p186, %p187
      %p189 = scmp.ne.s32.totalorder %s177, %s178
      %p190 = scmp.eq.s32.totalorder %s23, 3
      %p191 = por %p189, %p190
      %p193 = scmp.ne.s32.totalorder %s178, %s192
      %p194 = scmp.eq.s32.totalorder %s23, 0
      %p195 = por %p193, %p194
      %s197 = sadd.s32 %s196, 1
      %p200 = scmp.eq.s32.totalorder %s17, 3
      %p201 = scmp.ne.s32.totalorder %s196, %s198
      %p202 = scmp.eq.s32.totalorder %s17, 0
      %p203 = por %p201, %p202
      %p204 = scmp.ne.s32.totalorder %s196, %s198
      %p205 = scmp.eq.s32.totalorder %s22, 3
      %p206 = por %p204, %p205
      %p207 = scmp.ne.s32.totalorder %s198, %s199
      %p208 = scmp.eq.s32.totalorder %s22, 0
      %p209 = por %p207, %p208
      %p210 = scmp.ne.s32.totalorder %s198, %s199
      %p211 = scmp.eq.s32.totalorder %s23, 3
      %p212 = por %p210, %p211
      %p214 = scmp.ne.s32.totalorder %s199, %s213
      %p215 = scmp.eq.s32.totalorder %s23, 0
      %p216 = por %p214, %p215
      %s218 = sadd.s32 %s217, 1
      %p221 = scmp.eq.s32.totalorder %s17, 3
      %p222 = scmp.ne.s32.totalorder %s217, %s219
      %p223 = scmp.eq.s32.totalorder %s17, 0
      %p224 = por %p222, %p223
      %p225 = scmp.ne.s32.totalorder %s217, %s219
      %p226 = scmp.eq.s32.totalorder %s22, 3
      %p227 = por %p225, %p226
      %p228 = scmp.ne.s32.totalorder %s219, %s220
      %p229 = scmp.eq.s32.totalorder %s22, 0
      %p230 = por %p228, %p229
      %p231 = scmp.ne.s32.totalorder %s219, %s220
      %p232 = scmp.eq.s32.totalorder %s23, 3
      %p233 = por %p231, %p232
      %p235 = scmp.ne.s32.totalorder %s220, %s234
      %p236 = scmp.eq.s32.totalorder %s23, 0
      %p237 = por %p235, %p236
      %s239 = sadd.s32 %s238, 1
      %p242 = scmp.eq.s32.totalorder %s17, 3
      %p243 = scmp.ne.s32.totalorder %s238, %s240
      %p244 = scmp.eq.s32.totalorder %s17, 0
      %p245 = por %p243, %p244
      %p246 = scmp.ne.s32.totalorder %s238, %s240
      %p247 = scmp.eq.s32.totalorder %s22, 3
      %p248 = por %p246, %p247
      %p249 = scmp.ne.s32.totalorder %s240, %s241
      %p250 = scmp.eq.s32.totalorder %s22, 0
      %p251 = por %p249, %p250
      %p252 = scmp.ne.s32.totalorder %s240, %s241
      %p253 = scmp.eq.s32.totalorder %s23, 3
      %p254 = por %p252, %p253
      %p256 = scmp.ne.s32.totalorder %s241, %s255
      %p257 = scmp.eq.s32.totalorder %s23, 0
      %p258 = por %p256, %p257
      %s260 = sadd.s32 %s259, 1
      %p263 = scmp.eq.s32.totalorder %s17, 3
      %p264 = scmp.ne.s32.totalorder %s259, %s261
      %p265 = scmp.eq.s32.totalorder %s17, 0
      %p266 = por %p264, %p265
      %p267 = scmp.ne.s32.totalorder %s259, %s261
      %p268 = scmp.eq.s32.totalorder %s22, 3
      %p269 = por %p267, %p268
      %p270 = scmp.ne.s32.totalorder %s261, %s262
      %p271 = scmp.eq.s32.totalorder %s22, 0
      %p272 = por %p270, %p271
      %p273 = scmp.ne.s32.totalorder %s261, %s262
      %p274 = scmp.eq.s32.totalorder %s23, 3
      %p275 = por %p273, %p274
      %p277 = scmp.ne.s32.totalorder %s262, %s276
      %p278 = scmp.eq.s32.totalorder %s23, 0
      %p279 = por %p277, %p278
      %s280 = ssub.s32 %s24, %s36
      %p281 = scmp.eq.s32.totalorder %s280, 0
      %s283 = sadd.s32 %s282, 1
      %s284 = scalar_select %p281, %s282, %s283
      %p287 = pneg %p281
      %p288 = scmp.eq.s32.totalorder %s17, 3
      %p289 = por %p287, %p288
      %p290 = scmp.ne.s32.totalorder %s282, %s285
      %p291 = scmp.eq.s32.totalorder %s17, 0
      %p292 = por %p290, %p291
      %p293 = scmp.ne.s32.totalorder %s282, %s285
      %p294 = scmp.eq.s32.totalorder %s22, 3
      %p295 = por %p293, %p294
      %p296 = scmp.ne.s32.totalorder %s285, %s286
      %p297 = scmp.eq.s32.totalorder %s22, 0
      %p298 = por %p296, %p297
      %p299 = scmp.ne.s32.totalorder %s285, %s286
      %p300 = scmp.eq.s32.totalorder %s23, 3
      %p301 = por %p299, %p300
      %p303 = scmp.ne.s32.totalorder %s286, %s302
      %p304 = scmp.eq.s32.totalorder %s23, 0
      %p305 = por %p303, %p304
      %p306 = scmp.le.s32.totalorder 1, %s17
      %p307 = scmp.lt.s32.totalorder %s17, 5
      %p308 = pnand %p306, %p307
      %p309 = pneg %p308
      // Predicated region
      $region9: #{actor_forward.1} parent=5 // pred_check
        _
      $region10: #{actor_forward.1} parent=5 // pred_check_branch
        %311 = sbr.rel (%p308) target = $region12
      $region11: #{actor_forward.1} parent=5 // pred_region
        %s312 = ssub.s32 %s17, 1
        // Predicated region
        $region13: #{actor_forward.1} parent=11 // pred_check
          %p313 = pneg %p104
        $region14: #{actor_forward.1} parent=11 // pred_check_branch
          %315 = sbr.rel (%p313) target = $region16
        $region15: #{actor_forward.1} parent=11 // pred_region
          _
        $region16: #{actor_forward.1} parent=11 // pred_fallthru
          _
        // Predicated region
        $region17: #{actor_forward.1} parent=11 // pred_check
          %p316 = pneg %p125
        $region18: #{actor_forward.1} parent=11 // pred_check_branch
          %318 = sbr.rel (%p316) target = $region20
        $region19: #{actor_forward.1} parent=11 // pred_region
          _
        $region20: #{actor_forward.1} parent=11 // pred_fallthru
          _
        // Predicated region
        $region21: #{actor_forward.1} parent=11 // pred_check
          %p319 = pneg %p146
        $region22: #{actor_forward.1} parent=11 // pred_check_branch
          %321 = sbr.rel (%p319) target = $region24
        $region23: #{actor_forward.1} parent=11 // pred_region
          _
        $region24: #{actor_forward.1} parent=11 // pred_fallthru
          _
        // Predicated region
        $region25: #{actor_forward.1} parent=11 // pred_check
          %p322 = pneg %p167
        $region26: #{actor_forward.1} parent=11 // pred_check_branch
          %324 = sbr.rel (%p322) target = $region28
        $region27: #{actor_forward.1} parent=11 // pred_region
          _
        $region28: #{actor_forward.1} parent=11 // pred_fallthru
          _
        // Predicated region
        $region29: #{actor_forward.1} parent=11 // pred_check
          %p325 = pneg %p188
        $region30: #{actor_forward.1} parent=11 // pred_check_branch
          %327 = sbr.rel (%p325) target = $region32
        $region31: #{actor_forward.1} parent=11 // pred_region
          _
        $region32: #{actor_forward.1} parent=11 // pred_fallthru
          _
        // Predicated region
        $region33: #{actor_forward.1} parent=11 // pred_check
          %p328 = pneg %p209
        $region34: #{actor_forward.1} parent=11 // pred_check_branch
          %330 = sbr.rel (%p328) target = $region36
        $region35: #{actor_forward.1} parent=11 // pred_region
          _
        $region36: #{actor_forward.1} parent=11 // pred_fallthru
          _
        // Predicated region
        $region37: #{actor_forward.1} parent=11 // pred_check
          %p331 = pneg %p230
        $region38: #{actor_forward.1} parent=11 // pred_check_branch
          %333 = sbr.rel (%p331) target = $region40
        $region39: #{actor_forward.1} parent=11 // pred_region
          _
        $region40: #{actor_forward.1} parent=11 // pred_fallthru
          _
        // Predicated region
        $region41: #{actor_forward.1} parent=11 // pred_check
          %p334 = pneg %p251
        $region42: #{actor_forward.1} parent=11 // pred_check_branch
          %336 = sbr.rel (%p334) target = $region44
        $region43: #{actor_forward.1} parent=11 // pred_region
          _
        $region44: #{actor_forward.1} parent=11 // pred_fallthru
          _
        // Predicated region
        $region45: #{actor_forward.1} parent=11 // pred_check
          %p337 = pneg %p272
        $region46: #{actor_forward.1} parent=11 // pred_check_branch
          %339 = sbr.rel (%p337) target = $region48
        $region47: #{actor_forward.1} parent=11 // pred_region
          _
        $region48: #{actor_forward.1} parent=11 // pred_fallthru
          _
      $region12: #{actor_forward.1} parent=5 // pred_fallthru
        _
      %p340 = scmp.lt.s32.totalorder %s17, 4
      // Predicated region
      $region49: #{actor_forward.1} parent=5 // pred_check
        %p341 = pneg %p340
      $region50: #{actor_forward.1} parent=5 // pred_check_branch
        %343 = sbr.rel (%p341) target = $region52
      $region51: #{actor_forward.1} parent=5 // pred_region
        // Predicated region
        $region53: #{actor_forward.1} parent=51 // pred_check
          %p344 = pneg %p51
        $region54: #{actor_forward.1} parent=51 // pred_check_branch
          %346 = sbr.rel (%p344) target = $region56
        $region55: #{actor_forward.1} parent=51 // pred_region
          %s347 = sand.u32 %s41, 1
          %s348 = sand.u32 %s41, 1
          %s349 = smul.addr %s348, 8
          %s350 = scalar_lea.vmem [#allocation3], %s349
          %s351 = smul.u32 2, %s24
          %s352 = smul.addr %s351, 2
          %s353 = sadd.s32 %s25, %s352
          %s354 = smul.addr %s353, 4
          %s355 = scalar_lea.vmem %s0, %s354
          // Predicated region
          $region57: #{actor_forward.1} parent=55 // pred_check
            _
          $region58: #{actor_forward.1} parent=55 // pred_check_branch
            %357 = sbr.rel (0) target = $region60
          $region59: #{actor_forward.1} parent=55 // pred_region
            // Predicated region
            $region61: #{actor_forward.1} parent=59 // pred_check
              _
            $region62: #{actor_forward.1} parent=59 // pred_check_branch
              %359 = sbr.rel target = $region64
            $region63: #{actor_forward.1} parent=59 // pred_region
              // Predicated region
              $region76: #{actor_forward.1} parent=63 // pred_check
                _
              $region77: #{actor_forward.1} parent=63 // pred_check_branch
                %377 = sbr.rel (0) target = $region79
              $region78: #{actor_forward.1} parent=63 // pred_region
                loop: start=0, step=1, limit=1
                $region80: #{actor_forward.1} parent=78 // loop_pre_header
                  _
                $region81: #{actor_forward.1} parent=78 // loop_header
                  %s379 = sphi 0, %s383
                  %p380 = scmp.ge.s32.totalorder %s379, 1
                  %s384 = sphi %s355, %s355
                  %s385 = sphi %s350, %s350
                $region82: #{actor_forward.1} parent=78 // loop_header_branch
                  %382 = sbr.rel (%p380) target = $region86
                $region83: #{actor_forward.1} parent=78 // loop_body
                  _
                $region84: #{actor_forward.1} parent=78 // loop_footer
                  %s383 = sadd.s32 1, %s379
                $region85: #{actor_forward.1} parent=78 // loop_footer_branch
                  %378 = sbr.rel target = $region81
                $region86: #{actor_forward.1} parent=78 // loop_exit
                  _
                %s387 = ssub.s32 16, 1
                loop: start=0, step=1, limit=1
                $region87: #{actor_forward.1} parent=78 // loop_pre_header
                  _
                $region88: #{actor_forward.1} parent=78 // loop_header
                  %s389 = sphi 0, %s393
                  %p390 = scmp.ge.s32.totalorder %s389, 1
                  %s394 = sphi %s355, %s355
                  %s395 = sphi %s350, %s350
                $region89: #{actor_forward.1} parent=78 // loop_header_branch
                  %392 = sbr.rel (%p390) target = $region93
                $region90: #{actor_forward.1} parent=78 // loop_body
                  %v396 = vld [vmem:[%s394] sm:%s387]
                  %397 = vst [vmem:[%s395] sm:%s387] %v396
                  %v398 = vld [vmem:[%s394 + $0x8] sm:%s387]
                  %399 = vst [vmem:[%s395 + $0x4] sm:%s387] %v398
                $region91: #{actor_forward.1} parent=78 // loop_footer
                  %s393 = sadd.s32 1, %s389
                $region92: #{actor_forward.1} parent=78 // loop_footer_branch
                  %388 = sbr.rel target = $region88
                $region93: #{actor_forward.1} parent=78 // loop_exit
                  _
              $region79: #{actor_forward.1} parent=63 // pred_fallthru
                _
            $region64: #{actor_forward.1} parent=59 // pred_fallthru
              _
            // Predicated region
            $region65: #{actor_forward.1} parent=59 // pred_check
              _
            $region66: #{actor_forward.1} parent=59 // pred_check_branch
              %361 = sbr.rel (0) target = $region68
            $region67: #{actor_forward.1} parent=59 // pred_region
              %s363 = ssub.s32 16, 1
              loop: start=0, step=1, limit=1
              $region69: #{actor_forward.1} parent=67 // loop_pre_header
                _
              $region70: #{actor_forward.1} parent=67 // loop_header
                %s365 = sphi 0, %s369
                %p366 = scmp.ge.s32.totalorder %s365, 1
                %s370 = sphi %s355, %s355
                %s371 = sphi %s350, %s350
              $region71: #{actor_forward.1} parent=67 // loop_header_branch
                %368 = sbr.rel (%p366) target = $region75
              $region72: #{actor_forward.1} parent=67 // loop_body
                %v372 = vld [vmem:[%s370] sm:%s363]
                %373 = vst [vmem:[%s371] sm:%s363] %v372
                %v374 = vld [vmem:[%s370 + $0x8] sm:%s363]
                %375 = vst [vmem:[%s371 + $0x4] sm:%s363] %v374
              $region73: #{actor_forward.1} parent=67 // loop_footer
                %s369 = sadd.s32 1, %s365
              $region74: #{actor_forward.1} parent=67 // loop_footer_branch
                %364 = sbr.rel target = $region70
              $region75: #{actor_forward.1} parent=67 // loop_exit
                _
            $region68: #{actor_forward.1} parent=59 // pred_fallthru
              _
          $region60: #{actor_forward.1} parent=55 // pred_fallthru
            _
          %400 = vnop
        $region56: #{actor_forward.1} parent=51 // pred_fallthru
          _
        // Predicated region
        $region94: #{actor_forward.1} parent=51 // pred_check
          %p401 = pneg %p77
        $region95: #{actor_forward.1} parent=51 // pred_check_branch
          %403 = sbr.rel (%p401) target = $region97
        $region96: #{actor_forward.1} parent=51 // pred_region
          %s404 = smul.u32 16, %s25
          %p405 = scmp.lt.s32.totalorder %s404, 31
          %s406 = scalar_select %p405, %s404, 31
          %s407 = smul.addr %s406, 4
          %s408 = scalar_lea.vmem %s1, %s407
          %s409 = smul.u32 16, %s25
        $region97: #{actor_forward.1} parent=51 // pred_fallthru
          _
      $region52: #{actor_forward.1} parent=5 // pred_fallthru
        _
      %p410 = scmp.le.s32.totalorder 1, %s17
      %p411 = scmp.lt.s32.totalorder %s17, 5
      %p412 = pnand %p410, %p411
      %p413 = pneg %p412
      // Predicated region
      $region98: #{actor_forward.1} parent=5 // pred_check
        _
      $region99: #{actor_forward.1} parent=5 // pred_check_branch
        %415 = sbr.rel (%p412) target = $region101
      $region100: #{actor_forward.1} parent=5 // pred_region
        %s416 = ssub.s32 %s17, 1
        %s417 = sand.u32 %s44, 1
        %s418 = sand.u32 %s44, 1
        %s419 = smul.addr %s418, 8
        %s420 = scalar_lea.vmem [#allocation3], %s419
        // Predicated region
        $region102: #{actor_forward.1} parent=100 // pred_check
          %p421 = pneg %p57
        $region103: #{actor_forward.1} parent=100 // pred_check_branch
          %423 = sbr.rel (%p421) target = $region105
        $region104: #{actor_forward.1} parent=100 // pred_region
          _
        $region105: #{actor_forward.1} parent=100 // pred_fallthru
          _
        %s424 = sand.u32 %s44, 1
        %s425 = sand.u32 %s44, 1
        %s426 = smul.addr %s425, 8
        %s427 = scalar_lea.vmem [#allocation3], %s426
        %p428 = pneg %p57
        %p429 = pneg %p54
        %s430 = smul.u32 16, %s27
        %p431 = scmp.lt.s32.totalorder %s430, 31
        %s432 = scalar_select %p431, %s430, 31
        %s433 = smul.addr %s432, 4
        %s434 = scalar_lea.vmem %s1, %s433
        %p435 = pneg %p83
        %p436 = pneg %p80
        %p437 = pneg %p104
        %p438 = pneg %p101
        %p439 = pneg %p125
        %p440 = pneg %p122
        %p441 = pneg %p146
        %p442 = pneg %p143
        %p443 = pneg %p167
        %p444 = pneg %p164
        %p445 = pneg %p188
        %p446 = pneg %p185
        %p447 = pneg %p209
        %p448 = pneg %p206
        %p449 = pneg %p230
        %p450 = pneg %p227
        %p451 = pneg %p251
        %p452 = pneg %p248
        %p453 = pneg %p272
        %p454 = pneg %p269
        %p455 = pneg %p298
        %p456 = pneg %p295
        %s457 = smul.u32 2, %s26
        %p458 = scmp.lt.s32.totalorder %s457, 3
        %s459 = scalar_select %p458, %s457, 3
        %s460 = smul.addr %s459, 8
        %s461 = scalar_lea.vmem %s11, %s460
        %s462 = smul.u32 2, %s26
        %s463 = smul.u32 16, %s27
        %p464 = scmp.lt.s32.totalorder %s463, 31
        %s465 = scalar_select %p464, %s463, 31
        %s466 = smul.addr %s465, 4
        %s467 = scalar_lea.vmem %s1, %s466
        %s468 = smul.u32 16, %s27
        %s469 = smul.u32 2, %s26
        %p470 = scmp.lt.s32.totalorder %s469, 3
        %s471 = scalar_select %p470, %s469, 3
        %s472 = smul.addr %s471, 8
        %s473 = scalar_lea.vmem %s11, %s472
        %s474 = smul.u32 2, %s26
        %p476 = scmp.eq.s32.totalorder %s27, 0
        // Predicated region
        $region106: #{actor_forward.1} parent=100 // pred_check
          %p477 = pneg %p476
        $region107: #{actor_forward.1} parent=100 // pred_check_branch
          %479 = sbr.rel (%p477) target = $region109
        $region108: #{actor_forward.1} parent=100 // pred_region
          %v480 = vld [vmem:[%s2] sm:$0x1]
          %v482 = vlaneseq
          %v483 = vshrl.u32 %v482, 7
          %v484 = vsub.s32 0, %v483
          %v485 = vrot.slane %v480, %v484
          %487 = vst [vmem:[#allocation2] sm:$0xff] %v485
          %488 = vst [vmem:[#allocation2 + $0x8] sm:$0xff] %v485
        $region109: #{actor_forward.1} parent=100 // pred_fallthru
          _
        %v489 = vld [vmem:[#allocation2] sm:$0xff]
        %v490 = vld [vmem:[#allocation2 + $0x8] sm:$0xff]
        %v491 = vld [vmem:[%s420] sm:$0xf]
        %v492 = vld [vmem:[%s420 + $0x4] sm:$0xf]
        %v493 = vld [vmem:[%s467] sm:$0xf]
        %v494 = vld [vmem:[%s467 + $0x4] sm:$0xf]
        %v495 = vld [vmem:[%s467 + $0x8] sm:$0xf]
        %v496 = vld [vmem:[%s467 + $0xc] sm:$0xf]
        %v497 = vld [vmem:[%s467 + $0x10] sm:$0xf]
        %v498 = vld [vmem:[%s467 + $0x14] sm:$0xf]
        %v499 = vld [vmem:[%s467 + $0x18] sm:$0xf]
        %v500 = vld [vmem:[%s467 + $0x1c] sm:$0xf]
        %v501 = vld [vmem:[%s467 + $0x20] sm:$0xf]
        %v502 = vld [vmem:[%s467 + $0x24] sm:$0xf]
        %v503 = vld [vmem:[%s467 + $0x28] sm:$0xf]
        %v504 = vld [vmem:[%s467 + $0x2c] sm:$0xf]
        %v505 = vld [vmem:[%s467 + $0x30] sm:$0xf]
        %v506 = vld [vmem:[%s467 + $0x34] sm:$0xf]
        %v507 = vld [vmem:[%s467 + $0x38] sm:$0xf]
        %v508 = vld [vmem:[%s467 + $0x3c] sm:$0xf]
        %v511 = vunpack.c.l.b16 %v491
        %v512 = vunpack.c.l.b16 %v492
        %v513 = vpack.c.b16 %v512, %v511
        %v531 = vunpack.c.l.b16 %v493
        %v532 = vunpack.c.l.b16 %v494
        %v533 = vunpack.c.l.b16 %v495
        %v534 = vunpack.c.l.b16 %v496
        %v535 = vunpack.c.l.b16 %v497
        %v536 = vunpack.c.l.b16 %v498
        %v537 = vunpack.c.l.b16 %v499
        %v538 = vunpack.c.l.b16 %v500
        %v539 = vunpack.c.l.b16 %v501
        %v540 = vunpack.c.l.b16 %v502
        %v541 = vunpack.c.l.b16 %v503
        %v542 = vunpack.c.l.b16 %v504
        %v543 = vunpack.c.l.b16 %v505
        %v544 = vunpack.c.l.b16 %v506
        %v545 = vunpack.c.l.b16 %v507
        %v546 = vunpack.c.l.b16 %v508
        %v547 = vpack.c.b16 %v532, %v531
        %v548 = vpack.c.b16 %v534, %v533
        %v549 = vpack.c.b16 %v536, %v535
        %v550 = vpack.c.b16 %v538, %v537
        %v551 = vpack.c.b16 %v540, %v539
        %v552 = vpack.c.b16 %v542, %v541
        %v553 = vpack.c.b16 %v544, %v543
        %v554 = vpack.c.b16 %v546, %v545
        %563 = vmatprep.subr.bf16.mxu0 0
        %564 = vmatpush1.bf16.msra.mxu0 %v554
        %565 = vmatprep.subr.bf16.mxu0 0
        %566 = vmatpush1.bf16.msra.mxu0 %v553
        %567 = vmatprep.subr.bf16.mxu0 0
        %568 = vmatpush1.bf16.msra.mxu0 %v552
        %569 = vmatprep.subr.bf16.mxu0 0
        %570 = vmatpush1.bf16.msra.mxu0 %v551
        %571 = vmatprep.subr.bf16.mxu0 0
        %572 = vmatpush1.bf16.msra.mxu0 %v550
        %573 = vmatprep.subr.bf16.mxu0 0
        %574 = vmatpush1.bf16.msra.mxu0 %v549
        %575 = vmatprep.subr.bf16.mxu0 0
        %576 = vmatpush1.bf16.msra.mxu0 %v548
        %577 = vmatprep.subr.bf16.mxu0 0
        %578 = vmatpush1.bf16.msra.mxu0 %v547
        %579 = vmatprep.subr.bf16.mxu0 0
        %580 = vmatpush2.bf16.msra.mxu0 0
        %581 = vmatprep.subr.bf16.mxu0 0
        %582 = vmatpush2.bf16.msra.mxu0 0
        %583 = vmatprep.subr.bf16.mxu0 0
        %584 = vmatpush2.bf16.msra.mxu0 0
        %585 = vmatprep.subr.bf16.mxu0 0
        %586 = vmatpush2.bf16.msra.mxu0 0
        %587 = vmatprep.subr.bf16.mxu0 0
        %588 = vmatpush2.bf16.msra.mxu0 0
        %589 = vmatprep.subr.bf16.mxu0 0
        %590 = vmatpush2.bf16.msra.mxu0 0
        %591 = vmatprep.subr.bf16.mxu0 0
        %592 = vmatpush2.bf16.msra.mxu0 0
        %593 = vmatprep.subr.bf16.mxu0 0
        %594 = vmatpush2.bf16.msra.mxu0 0
        %595 = vmatprep.mubr.bf16.mxu0 0
        %596 = vmatmul.mubr.bf16.gmra.mxu0 %v513
        %v597 = vpop.f32.mrf.mxu0
        %v598 = vadd.f32 0.0, %v597
        %v599 = vpop.f32.mrf.mxu0
        %v600 = vpop.f32.mrf.mxu0
        %v601 = vadd.f32 0.0, %v600
        %v602 = vpop.f32.mrf.mxu0
        %603 = vdwg.mxu0
        %v604 = vadd.f32 %v489, %v598
        %v605 = vadd.f32 %v490, %v601
        %606 = vst [vmem:[#allocation2] sm:$0xff] %v604
        %607 = vst [vmem:[#allocation2 + $0x8] sm:$0xff] %v605
        %p608 = scmp.eq.s32.totalorder %s27, 1
        // Predicated region
        $region110: #{actor_forward.1} parent=100 // pred_check
          %p609 = pneg %p608
        $region111: #{actor_forward.1} parent=100 // pred_check_branch
          %611 = sbr.rel (%p609) target = $region113
        $region112: #{actor_forward.1} parent=100 // pred_region
          %v612 = vld [vmem:[#allocation2] sm:$0xff]
          %v613 = vld [vmem:[#allocation2 + $0x8] sm:$0xff]
          %v614 = vmax.f32 %v612, 0.0
          %v615 = vmax.f32 %v613, 0.0
          %v616 = vpack.c.bf16 %v615, %v614
          %v617 = vld [vmem:[%s3] sm:$0xf]
          %v618 = vld [vmem:[%s3 + $0x4] sm:$0xf]
          %v619 = vld [vmem:[%s3 + $0x8] sm:$0xf]
          %v620 = vld [vmem:[%s3 + $0xc] sm:$0xf]
          %v621 = vld [vmem:[%s3 + $0x10] sm:$0xf]
          %v622 = vld [vmem:[%s3 + $0x14] sm:$0xf]
          %v623 = vld [vmem:[%s3 + $0x18] sm:$0xf]
          %v624 = vld [vmem:[%s3 + $0x1c] sm:$0xf]
          %v625 = vld [vmem:[%s3 + $0x20] sm:$0xf]
          %v626 = vld [vmem:[%s3 + $0x24] sm:$0xf]
          %v627 = vld [vmem:[%s3 + $0x28] sm:$0xf]
          %v628 = vld [vmem:[%s3 + $0x2c] sm:$0xf]
          %v629 = vld [vmem:[%s3 + $0x30] sm:$0xf]
          %v630 = vld [vmem:[%s3 + $0x34] sm:$0xf]
          %v631 = vld [vmem:[%s3 + $0x38] sm:$0xf]
          %v632 = vld [vmem:[%s3 + $0x3c] sm:$0xf]
          %v633 = vld [vmem:[%s4] sm:$0x1]
          %v635 = vlaneseq
          %v636 = vshrl.u32 %v635, 7
          %v637 = vsub.s32 0, %v636
          %v638 = vrot.slane %v633, %v637
          %v656 = vunpack.c.l.b16 %v617
          %v657 = vunpack.c.l.b16 %v618
          %v658 = vunpack.c.l.b16 %v619
          %v659 = vunpack.c.l.b16 %v620
          %v660 = vunpack.c.l.b16 %v621
          %v661 = vunpack.c.l.b16 %v622
          %v662 = vunpack.c.l.b16 %v623
          %v663 = vunpack.c.l.b16 %v624
          %v664 = vunpack.c.l.b16 %v625
          %v665 = vunpack.c.l.b16 %v626
          %v666 = vunpack.c.l.b16 %v627
          %v667 = vunpack.c.l.b16 %v628
          %v668 = vunpack.c.l.b16 %v629
          %v669 = vunpack.c.l.b16 %v630
          %v670 = vunpack.c.l.b16 %v631
          %v671 = vunpack.c.l.b16 %v632
          %v672 = vpack.c.b16 %v657, %v656
          %v673 = vpack.c.b16 %v659, %v658
          %v674 = vpack.c.b16 %v661, %v660
          %v675 = vpack.c.b16 %v663, %v662
          %v676 = vpack.c.b16 %v665, %v664
          %v677 = vpack.c.b16 %v667, %v666
          %v678 = vpack.c.b16 %v669, %v668
          %v679 = vpack.c.b16 %v671, %v670
          %688 = vmatprep.subr.bf16.mxu0 0
          %689 = vmatpush1.bf16.msra.mxu0 %v679
          %690 = vmatprep.subr.bf16.mxu0 0
          %691 = vmatpush1.bf16.msra.mxu0 %v678
          %692 = vmatprep.subr.bf16.mxu0 0
          %693 = vmatpush1.bf16.msra.mxu0 %v677
          %694 = vmatprep.subr.bf16.mxu0 0
          %695 = vmatpush1.bf16.msra.mxu0 %v676
          %696 = vmatprep.subr.bf16.mxu0 0
          %697 = vmatpush1.bf16.msra.mxu0 %v675
          %698 = vmatprep.subr.bf16.mxu0 0
          %699 = vmatpush1.bf16.msra.mxu0 %v674
          %700 = vmatprep.subr.bf16.mxu0 0
          %701 = vmatpush1.bf16.msra.mxu0 %v673
          %702 = vmatprep.subr.bf16.mxu0 0
          %703 = vmatpush1.bf16.msra.mxu0 %v672
          %704 = vmatprep.subr.bf16.mxu0 0
          %705 = vmatpush2.bf16.msra.mxu0 0
          %706 = vmatprep.subr.bf16.mxu0 0
          %707 = vmatpush2.bf16.msra.mxu0 0
          %708 = vmatprep.subr.bf16.mxu0 0
          %709 = vmatpush2.bf16.msra.mxu0 0
          %710 = vmatprep.subr.bf16.mxu0 0
          %711 = vmatpush2.bf16.msra.mxu0 0
          %712 = vmatprep.subr.bf16.mxu0 0
          %713 = vmatpush2.bf16.msra.mxu0 0
          %714 = vmatprep.subr.bf16.mxu0 0
          %715 = vmatpush2.bf16.msra.mxu0 0
          %716 = vmatprep.subr.bf16.mxu0 0
          %717 = vmatpush2.bf16.msra.mxu0 0
          %718 = vmatprep.subr.bf16.mxu0 0
          %719 = vmatpush2.bf16.msra.mxu0 0
          %720 = vmatprep.mubr.bf16.mxu0 0
          %721 = vmatmul.mubr.bf16.gmra.mxu0 %v616
          %v722 = vpop.f32.mrf.mxu0
          %v723 = vadd.f32 %v638, %v722
          %v724 = vpop.f32.mrf.mxu0
          %v725 = vpop.f32.mrf.mxu0
          %v726 = vadd.f32 %v638, %v725
          %v727 = vpop.f32.mrf.mxu0
          %728 = vdwg.mxu0
          %v729 = vmax.f32 %v723, 0.0
          %v730 = vmax.f32 %v726, 0.0
          %v731 = vpack.c.bf16 %v730, %v729
          %v732 = vld [vmem:[%s5] sm:$0xf]
          %v733 = vld [vmem:[%s5 + $0x4] sm:$0xf]
          %v734 = vld [vmem:[%s5 + $0x8] sm:$0xf]
          %v735 = vld [vmem:[%s5 + $0xc] sm:$0xf]
          %v736 = vld [vmem:[%s5 + $0x10] sm:$0xf]
          %v737 = vld [vmem:[%s5 + $0x14] sm:$0xf]
          %v738 = vld [vmem:[%s5 + $0x18] sm:$0xf]
          %v739 = vld [vmem:[%s5 + $0x1c] sm:$0xf]
          %v740 = vld [vmem:[%s5 + $0x20] sm:$0xf]
          %v741 = vld [vmem:[%s5 + $0x24] sm:$0xf]
          %v742 = vld [vmem:[%s5 + $0x28] sm:$0xf]
          %v743 = vld [vmem:[%s5 + $0x2c] sm:$0xf]
          %v744 = vld [vmem:[%s5 + $0x30] sm:$0xf]
          %v745 = vld [vmem:[%s5 + $0x34] sm:$0xf]
          %v746 = vld [vmem:[%s5 + $0x38] sm:$0xf]
          %v747 = vld [vmem:[%s5 + $0x3c] sm:$0xf]
          %v748 = vld [vmem:[%s6] sm:$0x1]
          %v750 = vlaneseq
          %v751 = vshrl.u32 %v750, 7
          %v752 = vsub.s32 0, %v751
          %v753 = vrot.slane %v748, %v752
          %v771 = vunpack.c.l.b16 %v732
          %v772 = vunpack.c.l.b16 %v733
          %v773 = vunpack.c.l.b16 %v734
          %v774 = vunpack.c.l.b16 %v735
          %v775 = vunpack.c.l.b16 %v736
          %v776 = vunpack.c.l.b16 %v737
          %v777 = vunpack.c.l.b16 %v738
          %v778 = vunpack.c.l.b16 %v739
          %v779 = vunpack.c.l.b16 %v740
          %v780 = vunpack.c.l.b16 %v741
          %v781 = vunpack.c.l.b16 %v742
          %v782 = vunpack.c.l.b16 %v743
          %v783 = vunpack.c.l.b16 %v744
          %v784 = vunpack.c.l.b16 %v745
          %v785 = vunpack.c.l.b16 %v746
          %v786 = vunpack.c.l.b16 %v747
          %v787 = vpack.c.b16 %v772, %v771
          %v788 = vpack.c.b16 %v774, %v773
          %v789 = vpack.c.b16 %v776, %v775
          %v790 = vpack.c.b16 %v778, %v777
          %v791 = vpack.c.b16 %v780, %v779
          %v792 = vpack.c.b16 %v782, %v781
          %v793 = vpack.c.b16 %v784, %v783
          %v794 = vpack.c.b16 %v786, %v785
          %803 = vmatprep.subr.bf16.mxu0 0
          %804 = vmatpush1.bf16.msra.mxu0 %v794
          %805 = vmatprep.subr.bf16.mxu0 0
          %806 = vmatpush1.bf16.msra.mxu0 %v793
          %807 = vmatprep.subr.bf16.mxu0 0
          %808 = vmatpush1.bf16.msra.mxu0 %v792
          %809 = vmatprep.subr.bf16.mxu0 0
          %810 = vmatpush1.bf16.msra.mxu0 %v791
          %811 = vmatprep.subr.bf16.mxu0 0
          %812 = vmatpush1.bf16.msra.mxu0 %v790
          %813 = vmatprep.subr.bf16.mxu0 0
          %814 = vmatpush1.bf16.msra.mxu0 %v789
          %815 = vmatprep.subr.bf16.mxu0 0
          %816 = vmatpush1.bf16.msra.mxu0 %v788
          %817 = vmatprep.subr.bf16.mxu0 0
          %818 = vmatpush1.bf16.msra.mxu0 %v787
          %819 = vmatprep.subr.bf16.mxu0 0
          %820 = vmatpush2.bf16.msra.mxu0 0
          %821 = vmatprep.subr.bf16.mxu0 0
          %822 = vmatpush2.bf16.msra.mxu0 0
          %823 = vmatprep.subr.bf16.mxu0 0
          %824 = vmatpush2.bf16.msra.mxu0 0
          %825 = vmatprep.subr.bf16.mxu0 0
          %826 = vmatpush2.bf16.msra.mxu0 0
          %827 = vmatprep.subr.bf16.mxu0 0
          %828 = vmatpush2.bf16.msra.mxu0 0
          %829 = vmatprep.subr.bf16.mxu0 0
          %830 = vmatpush2.bf16.msra.mxu0 0
          %831 = vmatprep.subr.bf16.mxu0 0
          %832 = vmatpush2.bf16.msra.mxu0 0
          %833 = vmatprep.subr.bf16.mxu0 0
          %834 = vmatpush2.bf16.msra.mxu0 0
          %835 = vmatprep.mubr.bf16.mxu0 0
          %836 = vmatmul.mubr.bf16.gmra.mxu0 %v731
          %v837 = vpop.f32.mrf.mxu0
          %v838 = vadd.f32 %v753, %v837
          %v839 = vpop.f32.mrf.mxu0
          %v840 = vpop.f32.mrf.mxu0
          %v841 = vadd.f32 %v753, %v840
          %v842 = vpop.f32.mrf.mxu0
          %843 = vdwg.mxu0
          %v844 = vmax.f32 %v838, 0.0
          %v845 = vmax.f32 %v841, 0.0
          %v846 = vpack.c.bf16 %v845, %v844
          %v847 = vld [vmem:[%s7] sm:$0xf]
          %v848 = vld [vmem:[%s7 + $0x4] sm:$0xf]
          %v849 = vld [vmem:[%s7 + $0x8] sm:$0xf]
          %v850 = vld [vmem:[%s7 + $0xc] sm:$0xf]
          %v851 = vld [vmem:[%s7 + $0x10] sm:$0xf]
          %v852 = vld [vmem:[%s7 + $0x14] sm:$0xf]
          %v853 = vld [vmem:[%s7 + $0x18] sm:$0xf]
          %v854 = vld [vmem:[%s7 + $0x1c] sm:$0xf]
          %v855 = vld [vmem:[%s7 + $0x20] sm:$0xf]
          %v856 = vld [vmem:[%s7 + $0x24] sm:$0xf]
          %v857 = vld [vmem:[%s7 + $0x28] sm:$0xf]
          %v858 = vld [vmem:[%s7 + $0x2c] sm:$0xf]
          %v859 = vld [vmem:[%s7 + $0x30] sm:$0xf]
          %v860 = vld [vmem:[%s7 + $0x34] sm:$0xf]
          %v861 = vld [vmem:[%s7 + $0x38] sm:$0xf]
          %v862 = vld [vmem:[%s7 + $0x3c] sm:$0xf]
          %v863 = vld [vmem:[%s8] sm:$0x1]
          %v865 = vlaneseq
          %v866 = vshrl.u32 %v865, 7
          %v867 = vsub.s32 0, %v866
          %v868 = vrot.slane %v863, %v867
          %v886 = vunpack.c.l.b16 %v847
          %v887 = vunpack.c.l.b16 %v848
          %v888 = vunpack.c.l.b16 %v849
          %v889 = vunpack.c.l.b16 %v850
          %v890 = vunpack.c.l.b16 %v851
          %v891 = vunpack.c.l.b16 %v852
          %v892 = vunpack.c.l.b16 %v853
          %v893 = vunpack.c.l.b16 %v854
          %v894 = vunpack.c.l.b16 %v855
          %v895 = vunpack.c.l.b16 %v856
          %v896 = vunpack.c.l.b16 %v857
          %v897 = vunpack.c.l.b16 %v858
          %v898 = vunpack.c.l.b16 %v859
          %v899 = vunpack.c.l.b16 %v860
          %v900 = vunpack.c.l.b16 %v861
          %v901 = vunpack.c.l.b16 %v862
          %v902 = vpack.c.b16 %v887, %v886
          %v903 = vpack.c.b16 %v889, %v888
          %v904 = vpack.c.b16 %v891, %v890
          %v905 = vpack.c.b16 %v893, %v892
          %v906 = vpack.c.b16 %v895, %v894
          %v907 = vpack.c.b16 %v897, %v896
          %v908 = vpack.c.b16 %v899, %v898
          %v909 = vpack.c.b16 %v901, %v900
          %918 = vmatprep.subr.bf16.mxu0 0
          %919 = vmatpush1.bf16.msra.mxu0 %v909
          %920 = vmatprep.subr.bf16.mxu0 0
          %921 = vmatpush1.bf16.msra.mxu0 %v908
          %922 = vmatprep.subr.bf16.mxu0 0
          %923 = vmatpush1.bf16.msra.mxu0 %v907
          %924 = vmatprep.subr.bf16.mxu0 0
          %925 = vmatpush1.bf16.msra.mxu0 %v906
          %926 = vmatprep.subr.bf16.mxu0 0
          %927 = vmatpush1.bf16.msra.mxu0 %v905
          %928 = vmatprep.subr.bf16.mxu0 0
          %929 = vmatpush1.bf16.msra.mxu0 %v904
          %930 = vmatprep.subr.bf16.mxu0 0
          %931 = vmatpush1.bf16.msra.mxu0 %v903
          %932 = vmatprep.subr.bf16.mxu0 0
          %933 = vmatpush1.bf16.msra.mxu0 %v902
          %934 = vmatprep.subr.bf16.mxu0 0
          %935 = vmatpush2.bf16.msra.mxu0 0
          %936 = vmatprep.subr.bf16.mxu0 0
          %937 = vmatpush2.bf16.msra.mxu0 0
          %938 = vmatprep.subr.bf16.mxu0 0
          %939 = vmatpush2.bf16.msra.mxu0 0
          %940 = vmatprep.subr.bf16.mxu0 0
          %941 = vmatpush2.bf16.msra.mxu0 0
          %942 = vmatprep.subr.bf16.mxu0 0
          %943 = vmatpush2.bf16.msra.mxu0 0
          %944 = vmatprep.subr.bf16.mxu0 0
          %945 = vmatpush2.bf16.msra.mxu0 0
          %946 = vmatprep.subr.bf16.mxu0 0
          %947 = vmatpush2.bf16.msra.mxu0 0
          %948 = vmatprep.subr.bf16.mxu0 0
          %949 = vmatpush2.bf16.msra.mxu0 0
          %950 = vmatprep.mubr.bf16.mxu0 0
          %951 = vmatmul.mubr.bf16.gmra.mxu0 %v846
          %v952 = vpop.f32.mrf.mxu0
          %v953 = vadd.f32 %v868, %v952
          %v954 = vpop.f32.mrf.mxu0
          %v955 = vpop.f32.mrf.mxu0
          %v956 = vadd.f32 %v868, %v955
          %v957 = vpop.f32.mrf.mxu0
          %958 = vdwg.mxu0
          %v959 = vmax.f32 %v953, 0.0
          %v960 = vmax.f32 %v956, 0.0
          %v961 = vpack.c.bf16 %v960, %v959
          %v962 = vld [vmem:[%s9] sm:$0xf]
          %v963 = vld [vmem:[%s9 + $0x4] sm:$0xf]
          %v964 = vld [vmem:[%s9 + $0x8] sm:$0xf]
          %v965 = vld [vmem:[%s9 + $0xc] sm:$0xf]
          %v966 = vld [vmem:[%s9 + $0x10] sm:$0xf]
          %v967 = vld [vmem:[%s9 + $0x14] sm:$0xf]
          %v968 = vld [vmem:[%s9 + $0x18] sm:$0xf]
          %v969 = vld [vmem:[%s9 + $0x1c] sm:$0xf]
          %v970 = vld [vmem:[%s9 + $0x20] sm:$0xf]
          %v971 = vld [vmem:[%s9 + $0x24] sm:$0xf]
          %v972 = vld [vmem:[%s9 + $0x28] sm:$0xf]
          %v973 = vld [vmem:[%s9 + $0x2c] sm:$0xf]
          %v974 = vld [vmem:[%s9 + $0x30] sm:$0xf]
          %v975 = vld [vmem:[%s9 + $0x34] sm:$0xf]
          %v976 = vld [vmem:[%s9 + $0x38] sm:$0xf]
          %v977 = vld [vmem:[%s9 + $0x3c] sm:$0xf]
          %v978 = vld [vmem:[%s10] sm:$0x1]
          %v980 = vlaneseq
          %v981 = vshrl.u32 %v980, 7
          %v982 = vsub.s32 0, %v981
          %v983 = vrot.slane %v978, %v982
          %v1001 = vunpack.c.l.b16 %v962
          %v1002 = vunpack.c.l.b16 %v963
          %v1003 = vunpack.c.l.b16 %v964
          %v1004 = vunpack.c.l.b16 %v965
          %v1005 = vunpack.c.l.b16 %v966
          %v1006 = vunpack.c.l.b16 %v967
          %v1007 = vunpack.c.l.b16 %v968
          %v1008 = vunpack.c.l.b16 %v969
          %v1009 = vunpack.c.l.b16 %v970
          %v1010 = vunpack.c.l.b16 %v971
          %v1011 = vunpack.c.l.b16 %v972
          %v1012 = vunpack.c.l.b16 %v973
          %v1013 = vunpack.c.l.b16 %v974
          %v1014 = vunpack.c.l.b16 %v975
          %v1015 = vunpack.c.l.b16 %v976
          %v1016 = vunpack.c.l.b16 %v977
          %v1017 = vpack.c.b16 %v1002, %v1001
          %v1018 = vpack.c.b16 %v1004, %v1003
          %v1019 = vpack.c.b16 %v1006, %v1005
          %v1020 = vpack.c.b16 %v1008, %v1007
          %v1021 = vpack.c.b16 %v1010, %v1009
          %v1022 = vpack.c.b16 %v1012, %v1011
          %v1023 = vpack.c.b16 %v1014, %v1013
          %v1024 = vpack.c.b16 %v1016, %v1015
          %1033 = vmatprep.subr.bf16.mxu0 0
          %1034 = vmatpush1.bf16.msra.mxu0 %v1024
          %1035 = vmatprep.subr.bf16.mxu0 0
          %1036 = vmatpush1.bf16.msra.mxu0 %v1023
          %1037 = vmatprep.subr.bf16.mxu0 0
          %1038 = vmatpush1.bf16.msra.mxu0 %v1022
          %1039 = vmatprep.subr.bf16.mxu0 0
          %1040 = vmatpush1.bf16.msra.mxu0 %v1021
          %1041 = vmatprep.subr.bf16.mxu0 0
          %1042 = vmatpush1.bf16.msra.mxu0 %v1020
          %1043 = vmatprep.subr.bf16.mxu0 0
          %1044 = vmatpush1.bf16.msra.mxu0 %v1019
          %1045 = vmatprep.subr.bf16.mxu0 0
          %1046 = vmatpush1.bf16.msra.mxu0 %v1018
          %1047 = vmatprep.subr.bf16.mxu0 0
          %1048 = vmatpush1.bf16.msra.mxu0 %v1017
          %1049 = vmatprep.subr.bf16.mxu0 0
          %1050 = vmatpush2.bf16.msra.mxu0 0
          %1051 = vmatprep.subr.bf16.mxu0 0
          %1052 = vmatpush2.bf16.msra.mxu0 0
          %1053 = vmatprep.subr.bf16.mxu0 0
          %1054 = vmatpush2.bf16.msra.mxu0 0
          %1055 = vmatprep.subr.bf16.mxu0 0
          %1056 = vmatpush2.bf16.msra.mxu0 0
          %1057 = vmatprep.subr.bf16.mxu0 0
          %1058 = vmatpush2.bf16.msra.mxu0 0
          %1059 = vmatprep.subr.bf16.mxu0 0
          %1060 = vmatpush2.bf16.msra.mxu0 0
          %1061 = vmatprep.subr.bf16.mxu0 0
          %1062 = vmatpush2.bf16.msra.mxu0 0
          %1063 = vmatprep.subr.bf16.mxu0 0
          %1064 = vmatpush2.bf16.msra.mxu0 0
          %1065 = vmatprep.mubr.bf16.mxu0 0
          %1066 = vmatmul.mubr.bf16.gmra.mxu0 %v961
          %v1067 = vpop.f32.mrf.mxu0
          %v1068 = vadd.f32 %v983, %v1067
          %v1069 = vpop.f32.mrf.mxu0
          %v1070 = vpop.f32.mrf.mxu0
          %v1071 = vadd.f32 %v983, %v1070
          %v1072 = vpop.f32.mrf.mxu0
          %1073 = vdwg.mxu0
          %v1074 = vmax.f32 %v1068, 0.0
          %v1075 = vmax.f32 %v1071, 0.0
          %1076 = vst [vmem:[%s473] sm:$0xff] %v1074
          %1077 = vst [vmem:[%s473 + $0x8] sm:$0xff] %v1075
        $region113: #{actor_forward.1} parent=100 // pred_fallthru
          _
        %s1078 = smul.u32 2, %s26
        %p1079 = scmp.lt.s32.totalorder %s1078, 3
        %s1080 = scalar_select %p1079, %s1078, 3
        %s1081 = smul.addr %s1080, 8
        %s1082 = scalar_lea.vmem %s11, %s1081
        // Predicated region
        $region114: #{actor_forward.1} parent=100 // pred_check
          %p1083 = pneg %p295
        $region115: #{actor_forward.1} parent=100 // pred_check_branch
          %1085 = sbr.rel (%p1083) target = $region117
        $region116: #{actor_forward.1} parent=100 // pred_region
          %s1086 = smul.u32 2, %s26
        $region117: #{actor_forward.1} parent=100 // pred_fallthru
          _
      $region101: #{actor_forward.1} parent=5 // pred_fallthru
        _
      %p1087 = scmp.le.s32.totalorder 2, %s17
      // Predicated region
      $region118: #{actor_forward.1} parent=5 // pred_check
        %p1088 = pneg %p1087
      $region119: #{actor_forward.1} parent=5 // pred_check_branch
        %1090 = sbr.rel (%p1088) target = $region121
      $region120: #{actor_forward.1} parent=5 // pred_region
        %s1091 = ssub.s32 %s17, 2
        // Predicated region
        $region122: #{actor_forward.1} parent=120 // pred_check
          %p1092 = pneg %p301
        $region123: #{actor_forward.1} parent=120 // pred_check_branch
          %1094 = sbr.rel (%p1092) target = $region125
        $region124: #{actor_forward.1} parent=120 // pred_region
          %s1095 = smul.u32 2, %s28
          %p1096 = scmp.lt.s32.totalorder %s1095, 3
          %s1097 = scalar_select %p1096, %s1095, 3
          %s1098 = smul.addr %s1097, 8
          %s1099 = scalar_lea.vmem %s11, %s1098
        $region125: #{actor_forward.1} parent=120 // pred_fallthru
          _
      $region121: #{actor_forward.1} parent=5 // pred_fallthru
        _
    $region6: #{actor_forward.1} parent=1 // loop_footer
      %s21 = sadd.s32 1, %s17
    $region7: #{actor_forward.1} parent=1 // loop_footer_branch
      %16 = sbr.rel target = $region3
    $region8: #{actor_forward.1} parent=1 // loop_exit
      _

</llo_original>
